<compile_context>
chip_gen: v7x
topology: tpu7x:2x2x1
jax: 0.10.0
libtpu: 0.0.40
codegen_flags: <defaults>
</compile_context>

<pallas_src>
import functools

import jax
import jax.numpy as jnp
from jax.experimental import pallas as pl
from jax.experimental.pallas import tpu as pltpu


def _robust_loss_kernel(y_ref, yhat_ref, out_ref, acc_ref, *, eps, q, hw,
                        tile_s, needs_mask):
    j = pl.program_id(1)

    # Reset the per-batch-row accumulator at the first spatial tile.
    @pl.when(j == 0)
    def _():
        acc_ref[...] = jnp.zeros_like(acc_ref)

    # (C, TILE_S, 128) blocks, computed in f32.
    y = y_ref[0].astype(jnp.float32)
    yh = yhat_ref[0].astype(jnp.float32)
    diff = jnp.abs(y - yh)

    # Channel reduction over the leading axis: C-1 dense VPU adds (no XLU).
    ch_sum = jnp.sum(diff, axis=0)                      # (TILE_S, 128), >= 0
    base = ch_sum + jnp.float32(eps)                    # > 0 (requires eps > 0)
    # x ** q == exp(q * log(x)) for x > 0 (EUP transcendentals).
    # TODO(synk): relies on eps > 0; for eps <= 0 the log would need a guard.
    powed = jnp.exp(jnp.float32(q) * jnp.log(base))     # (TILE_S, 128)

    if needs_mask:
        # Mask out spatial padding / out-of-bounds boundary-tile elements.
        rows = jax.lax.broadcasted_iota(jnp.int32, (tile_s, 128), 0) + j * tile_s
        lanes = jax.lax.broadcasted_iota(jnp.int32, (tile_s, 128), 1)
        flat = rows * 128 + lanes
        powed = jnp.where(flat < hw, powed, jnp.float32(0.0))

    # Pure VPU accumulation; the expensive cross-lane reduce is deferred.
    acc_ref[...] += powed

    # Finalize once per batch row: one sublane reduction + lane-dense store.
    @pl.when(j == pl.num_programs(1) - 1)
    def _():
        out_ref[...] = jnp.sum(acc_ref[...], axis=0).reshape(1, 1, 128)


def robust_loss(y, y_hat, eps, q):
    """Pallas TPU implementation of RobustLoss.forward. Returns an f32 scalar."""
    assert y.shape == y_hat.shape
    N, C, H, W = y.shape
    hw = H * W
    itemsize = jnp.dtype(y.dtype).itemsize

    # Flatten spatial dims and make the last dim lane-dense (128).
    hw_pad = ((hw + 127) // 128) * 128
    y2 = y.reshape(N, C, hw)
    yh2 = y_hat.reshape(N, C, hw)
    if hw_pad != hw:
        pad = hw_pad - hw
        y2 = jnp.pad(y2, ((0, 0), (0, 0), (0, pad)))
        yh2 = jnp.pad(yh2, ((0, 0), (0, 0), (0, pad)))
    S = hw_pad // 128
    y4 = y2.reshape(N, C, S, 128)
    yh4 = yh2.reshape(N, C, S, 128)

    # Tile the sublane (S) axis so each input block is ~2 MiB (multiple of 8
    # sublanes, or the full axis when it is small).
    target_block_bytes = 2 * 1024 * 1024
    bytes_per_s_row = C * 128 * itemsize
    tile_s = max(8, (target_block_bytes // bytes_per_s_row) // 8 * 8)
    if tile_s >= S:
        tile_s = S
    num_j = pl.cdiv(S, tile_s)

    # Mask is only needed when the tiled/padded spatial extent exceeds H*W.
    needs_mask = (num_j * tile_s * 128) != hw

    kernel = functools.partial(
        _robust_loss_kernel,
        eps=float(eps), q=float(q), hw=hw, tile_s=tile_s, needs_mask=needs_mask)

    partials = pl.pallas_call(
        kernel,
        out_shape=jax.ShapeDtypeStruct((N, 1, 128), jnp.float32),
        grid=(N, num_j),
        in_specs=[
            pl.BlockSpec((1, C, tile_s, 128), lambda i, j: (i, 0, j, 0)),
            pl.BlockSpec((1, C, tile_s, 128), lambda i, j: (i, 0, j, 0)),
        ],
        # One lane-dense partial row per batch element, resident across the
        # spatial (reduction) axis.
        out_specs=pl.BlockSpec((1, 1, 128), lambda i, j: (i, 0, 0)),
        scratch_shapes=[pltpu.VMEM((tile_s, 128), jnp.float32)],
        compiler_params=pltpu.CompilerParams(
            dimension_semantics=("parallel", "arbitrary"),
        ),
        cost_estimate=pl.CostEstimate(
            flops=int(3 * N * C * hw),
            transcendentals=int(2 * N * hw),
            bytes_accessed=int(2 * N * C * hw * itemsize),
        ),
    )(y4, yh4)

    # Tiny final reduce of the (N, 1, 128) partials.
    return jnp.sum(partials)


def robust_loss_ref(y, y_hat, eps, q):
    """Pure-JAX reference (mirrors the PyTorch module exactly)."""
    y = y.astype(jnp.float32)
    y_hat = y_hat.astype(jnp.float32)
    return jnp.sum(jnp.power(jnp.sum(jnp.abs(y - y_hat), axis=1) + eps, q))


if __name__ == "__main__":
    # RobustLoss has no learned parameters; eps / q are constructor scalars.
    eps = 0.01
    q = 0.4

    key = jax.random.PRNGKey(0)
    ky, kh = jax.random.split(key)
    # NCHW, small shapes: batch=2, channels=4 (flow-like), spatial=16x16.
    y = jax.random.normal(ky, (2, 4, 16, 16), dtype=jnp.float32)
    y_hat = jax.random.normal(kh, (2, 4, 16, 16), dtype=jnp.float32)

    out = robust_loss(y, y_hat, eps, q)
    out = jax.block_until_ready(out)

    ref = robust_loss_ref(y, y_hat, eps, q)
    assert jnp.allclose(out, ref, rtol=1e-5, atol=1e-5), (out, ref)

    print("KERNEL_OK")
</pallas_src>

<mosaic_0001>
module attributes {stable_mosaic.version = 11 : i64} {
  func.func @_robust_loss_kernel(%arg0: i32, %arg1: i32, %arg2: memref<1x4x2x128xf32, #tpu.memory_space<vmem>>, %arg3: memref<1x4x2x128xf32, #tpu.memory_space<vmem>>, %arg4: memref<1x1x128xf32, #tpu.memory_space<vmem>>, %arg5: memref<2x128xf32, #tpu.memory_space<vmem>>) attributes {dimension_semantics = [#tpu.dimension_semantics<parallel>, #tpu.dimension_semantics<arbitrary>], iteration_bounds = array<i64: 2, 1>, scalar_prefetch = 0 : i64, scratch_operands = 1 : i64, tpu.core_type = #tpu.core_type<tc>, window_params = [{transform_indices = @transform_0, window_bounds = array<i64: 1, 4, 2, 128>}, {transform_indices = @transform_1, window_bounds = array<i64: 1, 4, 2, 128>}, {transform_indices = @transform_2, window_bounds = array<i64: 1, 1, 128>}]} {
    %c0_i32 = arith.constant 0 : i32
    %0 = arith.cmpi eq, %arg1, %c0_i32 : i32
    %1 = arith.extui %0 : i1 to i32
    %c0_i32_0 = arith.constant 0 : i32
    %2 = arith.cmpi ne, %1, %c0_i32_0 : i32
    scf.if %2 {
      %cst_16 = arith.constant 0.000000e+00 : f32
      %22 = vector.broadcast %cst_16 : f32 to vector<2x128xf32>
      %c0_17 = arith.constant 0 : index
      %c0_18 = arith.constant 0 : index
      %23 = vector.load %arg5[%c0_17, %c0_18] : memref<2x128xf32, #tpu.memory_space<vmem>>, vector<2x128xf32>
      tpu.vector_store %arg5[%c0_17, %c0_18], %22 {strides = array<i32>} : memref<2x128xf32, #tpu.memory_space<vmem>>, vector<2x128xf32>,
    } else {
    }
    %c0 = arith.constant 0 : index
    %c0_1 = arith.constant 0 : index
    %c0_2 = arith.constant 0 : index
    %c0_3 = arith.constant 0 : index
    %3 = vector.load %arg2[%c0, %c0_1, %c0_2, %c0_3] : memref<1x4x2x128xf32, #tpu.memory_space<vmem>>, vector<1x4x2x128xf32>
    %4 = vector.shape_cast %3 : vector<1x4x2x128xf32> to vector<4x2x128xf32>
    %c0_4 = arith.constant 0 : index
    %c0_5 = arith.constant 0 : index
    %c0_6 = arith.constant 0 : index
    %c0_7 = arith.constant 0 : index
    %5 = vector.load %arg3[%c0_4, %c0_5, %c0_6, %c0_7] : memref<1x4x2x128xf32, #tpu.memory_space<vmem>>, vector<1x4x2x128xf32>
    %6 = vector.shape_cast %5 : vector<1x4x2x128xf32> to vector<4x2x128xf32>
    %7 = arith.subf %4, %6 : vector<4x2x128xf32>
    %8 = math.absf %7 : vector<4x2x128xf32>
    %cst = arith.constant dense<0.000000e+00> : vector<2x128xf32>
    %9 = vector.multi_reduction <add>, %8, %cst [0] : vector<4x2x128xf32> to vector<2x128xf32>
    %cst_8 = arith.constant 0.00999999977 : f32
    %10 = vector.broadcast %cst_8 : f32 to vector<2x128xf32>
    %11 = arith.addf %9, %10 : vector<2x128xf32>
    %12 = math.log %11 : vector<2x128xf32>
    %cst_9 = arith.constant 4.000000e-01 : f32
    %13 = vector.broadcast %cst_9 : f32 to vector<2x128xf32>
    %14 = arith.mulf %13, %12 : vector<2x128xf32>
    %15 = math.exp %14 : vector<2x128xf32>
    %c0_10 = arith.constant 0 : index
    %c0_11 = arith.constant 0 : index
    %16 = vector.load %arg5[%c0_10, %c0_11] : memref<2x128xf32, #tpu.memory_space<vmem>>, vector<2x128xf32>
    %17 = arith.addf %16, %15 : vector<2x128xf32>
    %c0_12 = arith.constant 0 : index
    %c0_13 = arith.constant 0 : index
    %18 = vector.load %arg5[%c0_12, %c0_13] : memref<2x128xf32, #tpu.memory_space<vmem>>, vector<2x128xf32>
    tpu.vector_store %arg5[%c0_12, %c0_13], %17 {strides = array<i32>} : memref<2x128xf32, #tpu.memory_space<vmem>>, vector<2x128xf32>,
    %c0_i32_14 = arith.constant 0 : i32
    %19 = arith.cmpi eq, %arg1, %c0_i32_14 : i32
    %20 = arith.extui %19 : i1 to i32
    %c0_i32_15 = arith.constant 0 : i32
    %21 = arith.cmpi ne, %20, %c0_i32_15 : i32
    scf.if %21 {
      %c0_16 = arith.constant 0 : index
      %c0_17 = arith.constant 0 : index
      %22 = vector.load %arg5[%c0_16, %c0_17] : memref<2x128xf32, #tpu.memory_space<vmem>>, vector<2x128xf32>
      %cst_18 = arith.constant dense<0.000000e+00> : vector<128xf32>
      %23 = vector.multi_reduction <add>, %22, %cst_18 [0] : vector<2x128xf32> to vector<128xf32>
      %24 = vector.shape_cast %23 : vector<128xf32> to vector<1x1x128xf32>
      %c0_19 = arith.constant 0 : index
      %c0_20 = arith.constant 0 : index
      %c0_21 = arith.constant 0 : index
      %25 = vector.load %arg4[%c0_19, %c0_20, %c0_21] : memref<1x1x128xf32, #tpu.memory_space<vmem>>, vector<1x1x128xf32>
      tpu.vector_store %arg4[%c0_19, %c0_20, %c0_21], %24 {strides = array<i32>} : memref<1x1x128xf32, #tpu.memory_space<vmem>>, vector<1x1x128xf32>,
    } else {
    }
    return
  }
  func.func @transform_0(%arg0: i32, %arg1: i32) -> (i32, i32, i32, i32) {
    %c0_i32 = arith.constant 0 : i32
    %c0_i32_0 = arith.constant 0 : i32
    %c0_i32_1 = arith.constant 0 : i32
    return %arg0, %c0_i32, %arg1, %c0_i32_0 : i32, i32, i32, i32
  }
  func.func @transform_1(%arg0: i32, %arg1: i32) -> (i32, i32, i32, i32) {
    %c0_i32 = arith.constant 0 : i32
    %c0_i32_0 = arith.constant 0 : i32
    %c0_i32_1 = arith.constant 0 : i32
    return %arg0, %c0_i32, %arg1, %c0_i32_0 : i32, i32, i32, i32
  }
  func.func @transform_2(%arg0: i32, %arg1: i32) -> (i32, i32, i32) {
    %c0_i32 = arith.constant 0 : i32
    %c0_i32_0 = arith.constant 0 : i32
    %c0_i32_1 = arith.constant 0 : i32
    return %arg0, %c0_i32, %c0_i32_0 : i32, i32, i32
  }
}

</mosaic_0001>

<llo_original>
// kernel: tpu_custom_call.1
$region0: #{tpu_custom_call.1}
  #allocation0 [shape = 'u32[]', space=smem, size = 0x4, offset = 0x4, fixed_abs, tag = 'smem constant byte address 0x4 - core index']
  #allocation1 [shape = 'u32[144,128]{1,0:T(1,128)}', space=vmem, size = 0x12000, scoped, tag = 'internal scratch']
  #allocation2 [shape = 'f32[2,128]{1,0:T(2,128)}', space=vmem, size = 0x400, scoped, tag = 'scratch operand']
  %s0 = inlined_call_operand.hbm [shape: f32[2,4,2,128], index: 0, kind: input, shape index: {}]
  %s1 = inlined_call_operand.hbm [shape: f32[2,4,2,128], index: 1, kind: input, shape index: {}]
  %s2 = inlined_call_operand.hbm [shape: f32[2,1,128], index: 2, kind: output, shape index: {}]
  %s3 = sld [smem:[#allocation0]]
  $region57: #{tpu_custom_call.1} parent=0
    _
  %s5 = ssub.s32 1, %s3
  %s6 = scalar_select 0, %s5, %s3
  $region1: #{tpu_custom_call.1} parent=0
    #allocation3 [shape = 'u8[8192]{0}', space=vmem, size = 0x2000, scoped, tag = 'input window, operand 0']
    #allocation4 [shape = 's32[2]{0}', space=sflag, size = 0x8, scoped, tag = 'scoped memory for tpu_custom_call.1']
    #allocation5 [shape = 's32[2]{0}', space=sflag, size = 0x8, scoped, tag = 'scoped memory for tpu_custom_call.1']
    #allocation6 [shape = 'u8[8192]{0}', space=vmem, size = 0x2000, scoped, tag = 'input window, operand 1']
    #allocation7 [shape = 's32[2]{0}', space=sflag, size = 0x8, scoped, tag = 'scoped memory for tpu_custom_call.1']
    #allocation8 [shape = 'u8[1024]{0}', space=vmem, size = 0x400, scoped, tag = 'output window, operand 0']
    %7 = vsyncpa [#allocation4], 0
    %s8 = scalar_lea.sflag [#allocation4], 1
    %9 = vsyncpa %s8, 0
    %10 = vsyncpa [#allocation7], 0
    %s11 = scalar_lea.sflag [#allocation7], 1
    %12 = vsyncpa %s11, 0
    %13 = vsyncpa [#allocation5], 0
    %s14 = scalar_lea.sflag [#allocation5], 1
    %15 = vsyncpa %s14, 0
    loop: start=0, step=1, limit=4
    $region2: #{tpu_custom_call.1} parent=1 // loop_pre_header
      _
    $region3: #{tpu_custom_call.1} parent=1 // loop_header
      %s17 = sphi 0, %s21
      %p18 = scmp.ge.s32.totalorder %s17, 4
      %s24 = sphi 0, %s36
      %s25 = sphi 0, %s32
      %s26 = sphi 0, %s24
      %s27 = sphi 0, %s25
      %s28 = sphi 0, %s26
      %s29 = sphi 0, %s27
      %s41 = sphi 0, %s43
      %s44 = sphi 0, %s41
      %s45 = sphi 0, %s44
      %s61 = sphi 0, %s45
      %s69 = sphi 0, %s71
      %s72 = sphi 0, %s69
      %s73 = sphi 0, %s72
      %s89 = sphi 0, %s73
      %s95 = sphi 0, %s97
      %s98 = sphi 0, %s95
      %s99 = sphi 0, %s98
      %s115 = sphi 0, %s99
    $region4: #{tpu_custom_call.1} parent=1 // loop_header_branch
      %20 = sbr.rel (%p18) target = $region8
    $region5: #{tpu_custom_call.1} parent=1 // loop_body
      %s22 = ssub.s32 %s17, 1
      %s23 = ssub.s32 %s17, 2
      %s30 = sadd.s32 1, %s25
      %p31 = scmp.ge.s32.totalorder %s30, 1
      %s32 = scalar_select %p31, 0, %s30
      %s33 = sadd.s32 1, %s24
      %s34 = scalar_select %p31, %s33, %s24
      %p35 = scmp.ge.s32.totalorder %s34, 2
      %s36 = scalar_select %p35, 0, %s34
      %s37 = ssub.s32 %s24, %s36
      %s38 = ssub.s32 %s25, %s32
      %s39 = sor.u32 %s37, %s38
      %p40 = scmp.eq.s32.totalorder %s39, 0
      %s42 = sadd.s32 %s41, 1
      %s43 = scalar_select %p40, %s41, %s42
      %p46 = pneg %p40
      %p47 = scmp.eq.s32.totalorder %s17, 1
      %p48 = por %p46, %p47
      %p49 = scmp.ne.s32.totalorder %s41, %s44
      %p50 = scmp.eq.s32.totalorder %s17, 0
      %p51 = por %p49, %p50
      %p52 = scmp.ne.s32.totalorder %s41, %s44
      %p53 = scmp.eq.s32.totalorder %s22, 1
      %p54 = por %p52, %p53
      %p55 = scmp.ne.s32.totalorder %s44, %s45
      %p56 = scmp.eq.s32.totalorder %s22, 0
      %p57 = por %p55, %p56
      %p58 = scmp.ne.s32.totalorder %s44, %s45
      %p59 = scmp.eq.s32.totalorder %s23, 1
      %p60 = por %p58, %p59
      %p62 = scmp.ne.s32.totalorder %s45, %s61
      %p63 = scmp.eq.s32.totalorder %s23, 0
      %p64 = por %p62, %p63
      %s65 = ssub.s32 %s24, %s36
      %s66 = ssub.s32 %s25, %s32
      %s67 = sor.u32 %s65, %s66
      %p68 = scmp.eq.s32.totalorder %s67, 0
      %s70 = sadd.s32 %s69, 1
      %s71 = scalar_select %p68, %s69, %s70
      %p74 = pneg %p68
      %p75 = scmp.eq.s32.totalorder %s17, 1
      %p76 = por %p74, %p75
      %p77 = scmp.ne.s32.totalorder %s69, %s72
      %p78 = scmp.eq.s32.totalorder %s17, 0
      %p79 = por %p77, %p78
      %p80 = scmp.ne.s32.totalorder %s69, %s72
      %p81 = scmp.eq.s32.totalorder %s22, 1
      %p82 = por %p80, %p81
      %p83 = scmp.ne.s32.totalorder %s72, %s73
      %p84 = scmp.eq.s32.totalorder %s22, 0
      %p85 = por %p83, %p84
      %p86 = scmp.ne.s32.totalorder %s72, %s73
      %p87 = scmp.eq.s32.totalorder %s23, 1
      %p88 = por %p86, %p87
      %p90 = scmp.ne.s32.totalorder %s73, %s89
      %p91 = scmp.eq.s32.totalorder %s23, 0
      %p92 = por %p90, %p91
      %s93 = ssub.s32 %s24, %s36
      %p94 = scmp.eq.s32.totalorder %s93, 0
      %s96 = sadd.s32 %s95, 1
      %s97 = scalar_select %p94, %s95, %s96
      %p100 = pneg %p94
      %p101 = scmp.eq.s32.totalorder %s17, 1
      %p102 = por %p100, %p101
      %p103 = scmp.ne.s32.totalorder %s95, %s98
      %p104 = scmp.eq.s32.totalorder %s17, 0
      %p105 = por %p103, %p104
      %p106 = scmp.ne.s32.totalorder %s95, %s98
      %p107 = scmp.eq.s32.totalorder %s22, 1
      %p108 = por %p106, %p107
      %p109 = scmp.ne.s32.totalorder %s98, %s99
      %p110 = scmp.eq.s32.totalorder %s22, 0
      %p111 = por %p109, %p110
      %p112 = scmp.ne.s32.totalorder %s98, %s99
      %p113 = scmp.eq.s32.totalorder %s23, 1
      %p114 = por %p112, %p113
      %p116 = scmp.ne.s32.totalorder %s99, %s115
      %p117 = scmp.eq.s32.totalorder %s23, 0
      %p118 = por %p116, %p117
      %p119 = scmp.le.s32.totalorder 1, %s17
      %p120 = scmp.lt.s32.totalorder %s17, 3
      %p121 = pnand %p119, %p120
      %p122 = pneg %p121
      // Predicated region
      $region9: #{tpu_custom_call.1} parent=5 // pred_check
        _
      $region10: #{tpu_custom_call.1} parent=5 // pred_check_branch
        %124 = sbr.rel (%p121) target = $region12
      $region11: #{tpu_custom_call.1} parent=5 // pred_region
        %s125 = ssub.s32 %s17, 1
      $region12: #{tpu_custom_call.1} parent=5 // pred_fallthru
        _
      %p126 = scmp.lt.s32.totalorder %s17, 2
      // Predicated region
      $region13: #{tpu_custom_call.1} parent=5 // pred_check
        %p127 = pneg %p126
      $region14: #{tpu_custom_call.1} parent=5 // pred_check_branch
        %129 = sbr.rel (%p127) target = $region16
      $region15: #{tpu_custom_call.1} parent=5 // pred_region
        // Predicated region
        $region17: #{tpu_custom_call.1} parent=15 // pred_check
          %p130 = pneg %p51
        $region18: #{tpu_custom_call.1} parent=15 // pred_check_branch
          %132 = sbr.rel (%p130) target = $region20
        $region19: #{tpu_custom_call.1} parent=15 // pred_region
          %s133 = sand.u32 %s41, 1
          %s134 = scalar_lea.sflag [#allocation4], %s133
          %s135 = sand.u32 %s41, 1
          %s136 = smul.addr %s135, 8
          %s137 = scalar_lea.vmem [#allocation3], %s136
          %s139 = ssub.s32 128, 128
          %140 = vsyncadd %s134, %s139
          %s141 = smul.addr %s24, 4
          %s142 = sadd.s32 %s25, %s141
          %s143 = smul.addr %s142, 32
          %s144 = scalar_lea.hbm %s0, %s143
          %s145 = sshll.u32 %s137, 4
          %s146 = int_to_ptr.vmem [resolvable:$true] %s145
          %151 = dma.hbm_to_vmem [thread:$0]  %s144, 128, %s146, %s134, 32, 32, 2
        $region20: #{tpu_custom_call.1} parent=15 // pred_fallthru
          _
        // Predicated region
        $region21: #{tpu_custom_call.1} parent=15 // pred_check
          %p152 = pneg %p79
        $region22: #{tpu_custom_call.1} parent=15 // pred_check_branch
          %154 = sbr.rel (%p152) target = $region24
        $region23: #{tpu_custom_call.1} parent=15 // pred_region
          %s155 = sand.u32 %s69, 1
          %s156 = scalar_lea.sflag [#allocation7], %s155
          %s157 = sand.u32 %s69, 1
          %s158 = smul.addr %s157, 8
          %s159 = scalar_lea.vmem [#allocation6], %s158
          %s161 = ssub.s32 128, 128
          %162 = vsyncadd %s156, %s161
          %s163 = smul.addr %s24, 4
          %s164 = sadd.s32 %s25, %s163
          %s165 = smul.addr %s164, 32
          %s166 = scalar_lea.hbm %s1, %s165
          %s167 = sshll.u32 %s159, 4
          %s168 = int_to_ptr.vmem [resolvable:$true] %s167
          %173 = dma.hbm_to_vmem [thread:$0]  %s166, 128, %s168, %s156, 32, 32, 2
        $region24: #{tpu_custom_call.1} parent=15 // pred_fallthru
          _
      $region16: #{tpu_custom_call.1} parent=5 // pred_fallthru
        _
      %p174 = scmp.le.s32.totalorder 1, %s17
      %p175 = scmp.lt.s32.totalorder %s17, 3
      %p176 = pnand %p174, %p175
      %p177 = pneg %p176
      // Predicated region
      $region25: #{tpu_custom_call.1} parent=5 // pred_check
        _
      $region26: #{tpu_custom_call.1} parent=5 // pred_check_branch
        %179 = sbr.rel (%p176) target = $region28
      $region27: #{tpu_custom_call.1} parent=5 // pred_region
        %s180 = ssub.s32 %s17, 1
        %s181 = sand.u32 %s44, 1
        %s182 = scalar_lea.sflag [#allocation4], %s181
        %s183 = sand.u32 %s44, 1
        %s184 = smul.addr %s183, 8
        %s185 = scalar_lea.vmem [#allocation3], %s184
        // Predicated region
        $region29: #{tpu_custom_call.1} parent=27 // pred_check
          %p186 = pneg %p57
        $region30: #{tpu_custom_call.1} parent=27 // pred_check_branch
          %188 = sbr.rel (%p186) target = $region32
        $region31: #{tpu_custom_call.1} parent=27 // pred_region
          %189 = dma.done %s182, 128
        $region32: #{tpu_custom_call.1} parent=27 // pred_fallthru
          _
        %s190 = sand.u32 %s72, 1
        %s191 = scalar_lea.sflag [#allocation7], %s190
        %s192 = sand.u32 %s72, 1
        %s193 = smul.addr %s192, 8
        %s194 = scalar_lea.vmem [#allocation6], %s193
        // Predicated region
        $region33: #{tpu_custom_call.1} parent=27 // pred_check
          %p195 = pneg %p85
        $region34: #{tpu_custom_call.1} parent=27 // pred_check_branch
          %197 = sbr.rel (%p195) target = $region36
        $region35: #{tpu_custom_call.1} parent=27 // pred_region
          %198 = dma.done %s191, 128
        $region36: #{tpu_custom_call.1} parent=27 // pred_fallthru
          _
        %s199 = sand.u32 %s44, 1
        %s200 = scalar_lea.sflag [#allocation4], %s199
        %s201 = sand.u32 %s44, 1
        %s202 = smul.addr %s201, 8
        %s203 = scalar_lea.vmem [#allocation3], %s202
        %p204 = pneg %p57
        %p205 = pneg %p54
        %s206 = sand.u32 %s72, 1
        %s207 = scalar_lea.sflag [#allocation7], %s206
        %s208 = sand.u32 %s72, 1
        %s209 = smul.addr %s208, 8
        %s210 = scalar_lea.vmem [#allocation6], %s209
        %p211 = pneg %p85
        %p212 = pneg %p82
        %p213 = pneg %p111
        %p214 = pneg %p108
        %s215 = sand.u32 %s98, 1
        %s216 = scalar_lea.sflag [#allocation5], %s215
        %s217 = sand.u32 %s98, 1
        %s218 = scalar_lea.vmem [#allocation8], %s217
        %p219 = scmp.eq.s32.totalorder %s27, 0
        // Predicated region
        $region37: #{tpu_custom_call.1} parent=27 // pred_check
          %p220 = pneg %p219
        $region38: #{tpu_custom_call.1} parent=27 // pred_check_branch
          %222 = sbr.rel (%p220) target = $region40
        $region39: #{tpu_custom_call.1} parent=27 // pred_region
          %223 = vst [vmem:[#allocation2] sm:$0x3] 0.0
        $region40: #{tpu_custom_call.1} parent=27 // pred_fallthru
          _
        %v224 = vld [vmem:[%s185] sm:$0x3]
        %v225 = vld [vmem:[%s185 + $0x2] sm:$0x3]
        %v226 = vld [vmem:[%s185 + $0x4] sm:$0x3]
        %v227 = vld [vmem:[%s185 + $0x6] sm:$0x3]
        %v228 = vld [vmem:[%s194] sm:$0x3]
        %v229 = vld [vmem:[%s194 + $0x2] sm:$0x3]
        %v230 = vld [vmem:[%s194 + $0x4] sm:$0x3]
        %v231 = vld [vmem:[%s194 + $0x6] sm:$0x3]
        %v232 = vsub.f32 %v224, %v228
        %v233 = vsub.f32 %v225, %v229
        %v234 = vsub.f32 %v226, %v230
        %v235 = vsub.f32 %v227, %v231
        %v236 = vand.u32 2147483647, %v232
        %v237 = vand.u32 2147483647, %v233
        %v238 = vand.u32 2147483647, %v234
        %v239 = vand.u32 2147483647, %v235
        %vm240 = vcmask 1041408
        %v241 = vsel %vm240, %v236, 0.0
        %v242 = vsel %vm240, %v237, 0.0
        %v243 = vadd.f32 %v241, %v242
        %v244 = vsel %vm240, %v238, 0.0
        %v245 = vadd.f32 %v243, %v244
        %v246 = vsel %vm240, %v239, 0.0
        %v247 = vadd.f32 %v245, %v246
        %v248 = vadd.f32 %v247, 0.01
        %v249 = vlog2.pop %v248
        %v250 = vmul.f32 %v249, 0.6931472
        %v251 = vmul.f32 %v250, 0.4
        %v252 = vmul.f32 %v251, 1.442695
        %v253 = vpow.pop %v252
        %v254 = vld [vmem:[#allocation2] sm:$0x3]
        %v255 = vadd.f32 %v254, %v253
        %256 = vst [vmem:[#allocation2] sm:$0x3] %v255
        // Predicated region
        $region41: #{tpu_custom_call.1} parent=27 // pred_check
          %p257 = pneg %p219
        $region42: #{tpu_custom_call.1} parent=27 // pred_check_branch
          %259 = sbr.rel (%p257) target = $region44
        $region43: #{tpu_custom_call.1} parent=27 // pred_region
          %v260 = vld [vmem:[#allocation2] sm:$0x3]
          %v261 = vsel %vm240, %v260, 0.0
          %v262 = vrot.slane %v261, 4
          %v263 = vadd.f32 %v261, %v262
          %v264 = vrot.slane %v263, 2
          %v265 = vadd.f32 %v263, %v264
          %v266 = vrot.slane %v265, 1
          %v267 = vadd.f32 %v265, %v266
          %268 = vst [vmem:[%s218] sm:$0x1] %v267
        $region44: #{tpu_custom_call.1} parent=27 // pred_fallthru
          _
        %s269 = sand.u32 %s98, 1
        %s270 = scalar_lea.sflag [#allocation5], %s269
        %s271 = sand.u32 %s98, 1
        %s272 = scalar_lea.vmem [#allocation8], %s271
        // Predicated region
        $region45: #{tpu_custom_call.1} parent=27 // pred_check
          %p273 = pneg %p108
        $region46: #{tpu_custom_call.1} parent=27 // pred_check_branch
          %275 = sbr.rel (%p273) target = $region48
        $region47: #{tpu_custom_call.1} parent=27 // pred_region
          %s277 = ssub.s32 16, 16
          %278 = vsyncadd %s270, %s277
          %s279 = smul.addr %s26, 16
          %s280 = scalar_lea.hbm %s2, %s279
          %s282 = sshll.u32 %s272, 4
          %s283 = int_to_ptr.vmem [resolvable:$true] %s282
          %285 = dma.vmem_to_hbm [thread:$0]  %s283, 16, %s280, %s270
        $region48: #{tpu_custom_call.1} parent=27 // pred_fallthru
          _
      $region28: #{tpu_custom_call.1} parent=5 // pred_fallthru
        _
      %p286 = scmp.le.s32.totalorder 2, %s17
      // Predicated region
      $region49: #{tpu_custom_call.1} parent=5 // pred_check
        %p287 = pneg %p286
      $region50: #{tpu_custom_call.1} parent=5 // pred_check_branch
        %289 = sbr.rel (%p287) target = $region52
      $region51: #{tpu_custom_call.1} parent=5 // pred_region
        %s290 = ssub.s32 %s17, 2
        // Predicated region
        $region53: #{tpu_custom_call.1} parent=51 // pred_check
          %p291 = pneg %p114
        $region54: #{tpu_custom_call.1} parent=51 // pred_check_branch
          %293 = sbr.rel (%p291) target = $region56
        $region55: #{tpu_custom_call.1} parent=51 // pred_region
          %s294 = sand.u32 %s99, 1
          %s295 = scalar_lea.sflag [#allocation5], %s294
          %s296 = sand.u32 %s99, 1
          %s297 = scalar_lea.vmem [#allocation8], %s296
          %298 = dma.done %s295, 16
        $region56: #{tpu_custom_call.1} parent=51 // pred_fallthru
          _
      $region52: #{tpu_custom_call.1} parent=5 // pred_fallthru
        _
    $region6: #{tpu_custom_call.1} parent=1 // loop_footer
      %s21 = sadd.s32 1, %s17
    $region7: #{tpu_custom_call.1} parent=1 // loop_footer_branch
      %16 = sbr.rel target = $region3
    $region8: #{tpu_custom_call.1} parent=1 // loop_exit
      _
    %299 = vsyncpa [#allocation4], 1
    %s300 = scalar_lea.sflag [#allocation4], 1
    %301 = vsyncpa %s300, 1
    %302 = vsyncpa [#allocation7], 1
    %s303 = scalar_lea.sflag [#allocation7], 1
    %304 = vsyncpa %s303, 1
    %305 = vsyncpa [#allocation5], 1
    %s306 = scalar_lea.sflag [#allocation5], 1
    %307 = vsyncpa %s306, 1

</llo_original>
